<compile_context>
chip_gen: v7x
topology: tpu7x:2x2x1
jax: 0.10.0
libtpu: 0.0.40
codegen_flags: <defaults>
</compile_context>

<pallas_src>
import jax
import jax.numpy as jnp
from jax.experimental import pallas as pl
from jax.experimental.pallas import tpu as pltpu


# ----------------------------------------------------------------------------
# Helpers.
# ----------------------------------------------------------------------------
def _round_up(x, m):
    return ((x + m - 1) // m) * m


def _tpu_caps():
    """(tensorcores-per-device, rows_cap, vmem_cap_bytes), generation aware."""
    kind = ""
    try:
        kind = (jax.devices()[0].device_kind or "").lower()
    except Exception:
        pass
    two_tc = any(t in kind for t in ("v7", "7x", "v4", "v5p"))   # parts with 2 TCs / megacore
    small_vmem = ("v7" in kind) or ("7x" in kind)                # v7x: 64 MiB physical VMEM
    num_cores = 2 if two_tc else 1
    rows_cap = 4096 if small_vmem else 8192                      # flattened rows per block
    vmem_cap = (48 if small_vmem else 100) * 1024 * 1024
    return num_cores, rows_cap, vmem_cap


def _plan_tiling(bg, k, num_cores, rows_cap):
    """Return (tb, bg_pad, tk, k_pad).

    tb: group tile (multiple of 8).  tk: K tile (multiple of 16 so the in-kernel bf16
    (tb,tk,C)->(tb*tk,C) collapse is tile-aligned).  Rows per block = tb*tk <= rows_cap.
    On 2-TC parts the BG ("parallel") axis gets a step count that is a multiple of the
    core count so no core idles on a tail step; on 1-TC parts we keep one big tile.
    """
    bg8 = _round_up(max(bg, 1), 8)
    k16 = _round_up(max(k, 1), 16)
    tb_cap = 512

    tb = min(bg8, tb_cap)
    if num_cores > 1 and bg8 >= 8 * num_cores:
        n_steps = _round_up(max(-(-bg8 // tb), num_cores), num_cores)
        tb = _round_up(-(-bg8 // n_steps), 8)
        bg_pad = n_steps * tb
    else:
        bg_pad = _round_up(bg8, tb)

    tk_cap = max(16, (rows_cap // tb) // 16 * 16)
    tk = min(k16, tk_cap)
    k_pad = _round_up(k16, tk)
    return tb, bg_pad, tk, k_pad


def _vmem_limit_bytes(tb, tk, ws, bs, c_out_pad, vmem_cap):
    """Estimate the per-step VMEM footprint and derive vmem_limit_bytes (clamped)."""
    lane = lambda c: _round_up(max(int(c), 1), 128)
    rows = tb * tk
    fp = 2 * rows * lane(ws[0].shape[0]) * 2                      # bf16 input block, 2 buffers
    fp += 2 * rows * max(lane(w.shape[1]) for w in ws) * 4        # two widest live f32 activations
    fp += 2 * tb * lane(c_out_pad) * 4                            # f32 output block, 2 buffers
    fp += 2 * sum(_round_up(int(w.shape[0]), 16) * lane(w.shape[1]) * 2 for w in ws)
    fp += 2 * sum(8 * lane(b.shape[1]) * 4 for b in bs)
    return int(min(vmem_cap, max(32 * 1024 * 1024, (fp * 3) // 2)))


# ----------------------------------------------------------------------------
# Pallas kernel: fused pointwise-MLP stack + running max over the K grid axis.
# ----------------------------------------------------------------------------
def _make_sa_kernel(num_layers, tb, tk):
    def kernel(x_ref, *rest):
        w_refs = rest[0:num_layers]                  # bf16 (Cin_pad_i, Cout_pad_i), VMEM-resident
        b_refs = rest[num_layers:2 * num_layers]     # f32  (1, Cout_pad_i), VMEM-resident
        o_ref = rest[2 * num_layers]                 # f32  (tb, Cout_pad), resident across K axis

        c0 = x_ref.shape[-1]
        # tk % 16 == 0 -> tile-aligned collapse of the bf16 block; no relayout.
        h = x_ref[...].reshape(tb * tk, c0)
        for li in range(num_layers):
            acc = jnp.dot(h, w_refs[li][...], preferred_element_type=jnp.float32)
            # bias + ReLU (+ bf16 recast for the next MXU feed) as one fused chain; f32 math
            # (v5e VPU has no bf16 datapath).
            acc = jnp.maximum(acc + b_refs[li][...], 0.0)
            h = acc if li == num_layers - 1 else acc.astype(jnp.bfloat16)

        c_out_pad = h.shape[-1]                      # multiple of 128 -> tile-aligned reshape
        part = jnp.max(h.reshape(tb, tk, c_out_pad), axis=1)     # per-K-chunk max (tb, Cout_pad)

        k_id = pl.program_id(1)

        @pl.when(k_id == 0)
        def _():
            o_ref[...] = part

        @pl.when(k_id > 0)
        def _():
            o_ref[...] = jnp.maximum(o_ref[...], part)           # running max, VPU, overlaps MXU

    return kernel


def sa_block_pallas(x, ws, bs, tb, bg_pad, tk, vmem_cap):
    """x: (BG, k_pad, c0_pad) bf16, already K/channel-padded.  Returns (bg_pad, c_out_pad) f32."""
    BG, k_pad, c0_pad = x.shape
    num_layers = len(ws)
    c_out_pad = int(ws[-1].shape[1])

    if bg_pad != BG:
        # TODO(synk): for the grouped path this pad could be folded into the index gather
        # (pad grp_idx along the query axis) so the K-amplified tensor is born at bg_pad.
        x = jnp.pad(x, ((0, bg_pad - BG), (0, 0), (0, 0)))

    grid = (bg_pad // tb, k_pad // tk)

    # Weights/biases: constant-index blocks -> loaded once, stay VMEM-resident over the grid.
    # TODO(synk): pipeline_mode=pl.Buffered(1) on these constant specs would drop their second
    # pipeline buffer; omitted for portability across jax versions.
    in_specs = [pl.BlockSpec((tb, tk, c0_pad), lambda i, k: (i, k, 0))]
    for w in ws:
        in_specs.append(pl.BlockSpec(w.shape, lambda i, k: (0, 0)))
    for b in bs:
        in_specs.append(pl.BlockSpec(b.shape, lambda i, k: (0, 0)))
    # Lane-dense output (c_out_pad % 128 == 0); index_map ignores k -> resident running max.
    out_spec = pl.BlockSpec((tb, c_out_pad), lambda i, k: (i, 0))

    flops = 2 * (bg_pad * k_pad) * sum(int(w.shape[0]) * int(w.shape[1]) for w in ws)
    bytes_accessed = (int(x.size) * 2
                      + sum(int(w.size) * 2 for w in ws)
                      + sum(int(b.size) * 4 for b in bs)
                      + bg_pad * c_out_pad * 4)

    return pl.pallas_call(
        _make_sa_kernel(num_layers, tb, tk),
        out_shape=jax.ShapeDtypeStruct((bg_pad, c_out_pad), jnp.float32),
        grid=grid,
        in_specs=in_specs,
        out_specs=out_spec,
        compiler_params=pltpu.CompilerParams(
            dimension_semantics=("parallel", "arbitrary"),
            vmem_limit_bytes=_vmem_limit_bytes(tb, tk, ws, bs, c_out_pad, vmem_cap),
        ),
        cost_estimate=pl.CostEstimate(
            flops=flops, transcendentals=0, bytes_accessed=bytes_accessed),
    )(x, *ws, *bs)


# ----------------------------------------------------------------------------
# Plain-JAX glue: parameter init (deterministic), BN folding + channel padding,
# sampling / grouping.
# ----------------------------------------------------------------------------
def init_params(key, d_in, d_feats):
    params = []
    c_in = d_in
    for c_out in d_feats:
        key, k1, k2, k3, k4, k5, k6 = jax.random.split(key, 7)
        w = jax.random.normal(k1, (c_out, c_in), jnp.float32) / jnp.sqrt(float(c_in))
        b = 0.01 * jax.random.normal(k2, (c_out,), jnp.float32)
        gamma = 1.0 + 0.1 * jax.random.normal(k3, (c_out,), jnp.float32)
        beta = 0.1 * jax.random.normal(k4, (c_out,), jnp.float32)
        mean = 0.1 * jax.random.normal(k5, (c_out,), jnp.float32)
        var = 1.0 + 0.1 * jnp.abs(jax.random.normal(k6, (c_out,), jnp.float32))
        params.append((w, b, gamma, beta, mean, var))
        c_in = c_out
    return params


def fold_and_pad_bn(params, d_in, eps=1e-5):
    """Fold eval-mode BatchNorm into the 1x1-conv weights; zero-pad channel dims.

    Input channels pad to a multiple of 8 (cheap in HBM); every layer's output channels pad
    to a multiple of 128 (lane-dense stores, tile-aligned in-kernel reshape).  Zero padding
    keeps the math identical.  Also returns the unpadded f32 weights for a reference path.
    """
    c_pads = [_round_up(d_in, 8)] + [_round_up(w.shape[0], 128) for (w, *_r) in params]
    ws, bs, ws_f32, bs_f32 = [], [], [], []
    c_prev = d_in
    for i, (w, b, gamma, beta, mean, var) in enumerate(params):
        c_out = w.shape[0]
        scale = gamma / jnp.sqrt(var + eps)                 # (C_out,)
        wf = (w * scale[:, None]).T                         # (C_in, C_out)
        bf = ((b - mean) * scale + beta).reshape(1, -1)     # (1, C_out)
        ws_f32.append(wf)
        bs_f32.append(bf)
        wp = jnp.zeros((c_pads[i], c_pads[i + 1]), jnp.float32).at[:c_prev, :c_out].set(wf)
        bp = jnp.zeros((1, c_pads[i + 1]), jnp.float32).at[:, :c_out].set(bf)
        ws.append(wp.astype(jnp.bfloat16))
        bs.append(bp)
        c_prev = c_out
    return ws, bs, ws_f32, bs_f32, c_prev


def furthest_point_sampling(pnt, n_sample):
    """pnt: (B, N, 3) -> (B, n_sample) int32. Deterministic, seeded at index 0."""
    # TODO(synk): the serial n_sample-step loop dominates for large g_n; a small Pallas FPS
    # kernel (or a batched approximation) would be the next end-to-end win.
    B, N, _ = pnt.shape

    def per_batch(pts):
        def body(i, state):
            idxs, dists, last = state
            d = jnp.sum((pts - pts[last]) ** 2, axis=-1)
            dists = jnp.minimum(dists, d)
            nxt = jnp.argmax(dists).astype(jnp.int32)
            return idxs.at[i].set(nxt), dists, nxt

        idxs = jnp.zeros((n_sample,), jnp.int32)
        dists = jnp.full((N,), 1e10, jnp.float32)
        idxs, _, _ = jax.lax.fori_loop(1, n_sample, body, (idxs, dists, jnp.int32(0)))
        return idxs

    return jax.vmap(per_batch)(pnt)


def ball_query(pnt, qry, k, r):
    """pnt (B,N,3), qry (B,S,3) -> (B,S,k) int32: first k in-ball indices (index order),
    padded with the first in-ball point.  No O(N log N) sort: cumsum rank + scatter."""
    B, N, _ = pnt.shape
    S = qry.shape[1]
    d2 = jnp.sum((qry[:, :, None, :] - pnt[:, None, :, :]) ** 2, axis=-1)      # (B,S,N)
    mask = d2 <= r * r
    rank = jnp.cumsum(mask.astype(jnp.int32), axis=-1) - 1                     # position among in-ball
    first = jnp.argmax(mask, axis=-1).astype(jnp.int32)                        # first in-ball (0 if none)
    tgt = jnp.where(mask & (rank < k), rank, k)                                # k == out-of-bounds slot
    bidx = jnp.arange(B, dtype=jnp.int32)[:, None, None]
    sidx = jnp.arange(S, dtype=jnp.int32)[None, :, None]
    vals = jnp.broadcast_to(jnp.arange(N, dtype=jnp.int32), (B, S, N))
    filled = jnp.full((B, S, k), -1, jnp.int32).at[bidx, sidx, tgt].set(vals, mode="drop")
    # TODO(synk): exact tie-breaking / fill convention of the custom bpa CUDA op is unspecified;
    # this follows the standard PointNet++ convention (falls back to index 0 if the ball is empty).
    return jnp.where(filled >= 0, filled, first[:, :, None])


def gather_query(x, idx):
    """x (B,N,C), idx (B,S) -> (B,S,C)."""
    return jnp.take_along_axis(x, idx[:, :, None], axis=1)


def gather_group(x, idx):
    """x (B,N,C), idx (B,S,K) -> (B,S,K,C)."""
    B, S, K = idx.shape
    g = jnp.take_along_axis(x, idx.reshape(B, S * K)[:, :, None], axis=1)
    return g.reshape(B, S, K, x.shape[-1])


def sample_and_group(fea, pnt, g_n, g_k, g_r, k_pad=None, c0_pad=None):
    """Grouping; when k_pad/c0_pad are given, the grouped tensor is born already padded
    (K padded via the tiny index tensor, channels via the concat producer) so no extra
    HBM passes over the K-amplified tensor are needed downstream."""
    # TODO(synk): fuse the neighbor gather into the Pallas kernel (fea/pnt in pl.ANY +
    # grp_idx via PrefetchScalarGridSpec + in-kernel DMA gather) to avoid materializing
    # the K-amplified grouped tensor in HBM at all.
    qry_idx = furthest_point_sampling(pnt, g_n)                      # (B, g_n)
    qry_pnt = gather_query(pnt, qry_idx)                             # (B, g_n, 3)
    grp_idx = ball_query(pnt, qry_pnt, g_k, g_r)                     # (B, g_n, g_k)
    if k_pad is not None and k_pad > g_k:
        last = grp_idx[:, :, -1:]
        grp_idx = jnp.concatenate(
            [grp_idx, jnp.broadcast_to(last, last.shape[:2] + (k_pad - g_k,))], axis=-1)
    grp_pnt = gather_group(pnt, grp_idx) - qry_pnt[:, :, None, :]    # (B, g_n, K', 3)
    parts = []
    if fea is not None:
        parts.append(gather_group(fea, grp_idx))
    parts.append(grp_pnt)
    c_real = sum(t.shape[-1] for t in parts)
    if c0_pad is not None and c0_pad > c_real:
        B, S, K = grp_idx.shape
        parts.append(jnp.zeros((B, S, K, c0_pad - c_real), grp_pnt.dtype))
    return jnp.concatenate(parts, axis=-1), qry_pnt


# ----------------------------------------------------------------------------
# Module wrapper.
# ----------------------------------------------------------------------------
class PointNetSetAbstractionPallas:
    def __init__(self, g_n, g_r, g_k, d_in, d_feats, group_all, key):
        self.g_n, self.g_r, self.g_k = g_n, g_r, g_k
        self.group_all = group_all
        (self.ws, self.bs, self.ws_f32, self.bs_f32, self.c_out) = fold_and_pad_bn(
            init_params(key, d_in, list(d_feats)), d_in)
        self.num_cores, self.rows_cap, self.vmem_cap = _tpu_caps()

    def __call__(self, f, p):
        B, N = p.shape[0], p.shape[1]
        c0_pad = int(self.ws[0].shape[0])
        if self.group_all:
            BG, G, K = B, 1, N
        else:
            BG, G, K = B * self.g_n, self.g_n, self.g_k
        tb, bg_pad, tk, k_pad = _plan_tiling(BG, K, self.num_cores, self.rows_cap)

        if self.group_all:
            parts = ([f] if f is not None else []) + [p]
            c_real = sum(t.shape[-1] for t in parts)
            if c0_pad > c_real:
                parts.append(jnp.zeros((B, N, c0_pad - c_real), p.dtype))
            x = jnp.concatenate(parts, axis=-1)                            # (B, N, c0_pad)
            if k_pad > N:
                # Duplicate the last point: the max over K is invariant to duplicates.
                x = jnp.concatenate(
                    [x, jnp.broadcast_to(x[:, -1:, :], (B, k_pad - N, c0_pad))], axis=1)
            x = x.astype(jnp.bfloat16)                                     # (B, k_pad, c0_pad)
            p_out = None
        else:
            grp, p_out = sample_and_group(f, p, self.g_n, self.g_k, self.g_r,
                                          k_pad=k_pad, c0_pad=c0_pad)
            x = grp.astype(jnp.bfloat16).reshape(BG, k_pad, c0_pad)        # cast right after gather

        out = sa_block_pallas(x, self.ws, self.bs, tb, bg_pad, tk, self.vmem_cap)
        return out[:BG, :self.c_out].reshape(B, G, self.c_out), p_out


def _reference_forward(sa, f, p):
    """Pure-JAX f32 reference (unpadded, same folded BN params) for a tolerance check."""
    if sa.group_all:
        x = jnp.concatenate([f, p], axis=-1)[:, None, :, :]
    else:
        x, _ = sample_and_group(f, p, sa.g_n, sa.g_k, sa.g_r)
    h = x
    for w, b in zip(sa.ws_f32, sa.bs_f32):
        h = jnp.maximum(jnp.einsum('bgkc,cd->bgkd', h, w) + b[0], 0.0)
    return jnp.max(h, axis=2)


# ----------------------------------------------------------------------------
if __name__ == "__main__":
    key = jax.random.PRNGKey(0)
    kf, kp, km1, km2 = jax.random.split(key, 4)

    B, N, Cf = 2, 16, 4
    f = jax.random.normal(kf, (B, N, Cf), jnp.float32)   # per-point features, channels-last
    p = jax.random.normal(kp, (B, N, 3), jnp.float32)    # xyz coordinates

    # Path 1: group_all=True  -> (B,1,N,Cf+3) -> MLPs -> max over N -> (B,1,64)
    sa_all = PointNetSetAbstractionPallas(
        g_n=None, g_r=None, g_k=None, d_in=Cf + 3, d_feats=[32, 64],
        group_all=True, key=km1)
    f1, p1 = sa_all(f, p)
    f1 = jax.block_until_ready(f1)
    assert f1.shape == (B, 1, 64) and p1 is None
    r1 = _reference_forward(sa_all, f, p)
    err1 = float(jnp.max(jnp.abs(f1 - r1)))
    assert err1 <= 0.05 * (1.0 + float(jnp.max(jnp.abs(r1)))), ("group_all mismatch", err1)

    # Path 2: group_all=False -> sample_and_group -> (B,g_n,g_k,Cf+3) -> MLPs -> max over g_k
    sa_grp = PointNetSetAbstractionPallas(
        g_n=8, g_r=0.8, g_k=8, d_in=Cf + 3, d_feats=[16, 32],
        group_all=False, key=km2)
    f2, p2 = sa_grp(f, p)
    f2 = jax.block_until_ready(f2)
    p2 = jax.block_until_ready(p2)
    assert f2.shape == (B, 8, 32) and p2.shape == (B, 8, 3)
    r2 = _reference_forward(sa_grp, f, p)
    err2 = float(jnp.max(jnp.abs(f2 - r2)))
    assert err2 <= 0.05 * (1.0 + float(jnp.max(jnp.abs(r2)))), ("grouped mismatch", err2)

    print("KERNEL_OK")
</pallas_src>

<mosaic_0001>
module attributes {stable_mosaic.version = 11 : i64} {
  func.func @kernel(%arg0: i32, %arg1: i32, %arg2: memref<8x16x8xbf16, #tpu.memory_space<vmem>>, %arg3: memref<8x128xbf16, #tpu.memory_space<vmem>>, %arg4: memref<128x128xbf16, #tpu.memory_space<vmem>>, %arg5: memref<1x128xf32, #tpu.memory_space<vmem>>, %arg6: memref<1x128xf32, #tpu.memory_space<vmem>>, %arg7: memref<8x128xf32, #tpu.memory_space<vmem>>) attributes {dimension_semantics = [#tpu.dimension_semantics<parallel>, #tpu.dimension_semantics<arbitrary>], iteration_bounds = array<i64: 1, 1>, scalar_prefetch = 0 : i64, scratch_operands = 0 : i64, tpu.core_type = #tpu.core_type<tc>, window_params = [{transform_indices = @transform_0, window_bounds = array<i64: 8, 16, 8>}, {pipeline_mode = #tpu.pipeline_mode<synchronous>, transform_indices = @transform_1, window_bounds = array<i64: 8, 128>}, {pipeline_mode = #tpu.pipeline_mode<synchronous>, transform_indices = @transform_2, window_bounds = array<i64: 128, 128>}, {pipeline_mode = #tpu.pipeline_mode<synchronous>, transform_indices = @transform_3, window_bounds = array<i64: 1, 128>}, {pipeline_mode = #tpu.pipeline_mode<synchronous>, transform_indices = @transform_4, window_bounds = array<i64: 1, 128>}, {transform_indices = @transform_5, window_bounds = array<i64: 8, 128>}]} {
    %c0 = arith.constant 0 : index
    %c0_0 = arith.constant 0 : index
    %c0_1 = arith.constant 0 : index
    %0 = vector.load %arg2[%c0, %c0_0, %c0_1] : memref<8x16x8xbf16, #tpu.memory_space<vmem>>, vector<8x16x8xbf16>
    %1 = vector.shape_cast %0 : vector<8x16x8xbf16> to vector<128x8xbf16>
    %c0_2 = arith.constant 0 : index
    %c0_3 = arith.constant 0 : index
    %2 = vector.load %arg3[%c0_2, %c0_3] : memref<8x128xbf16, #tpu.memory_space<vmem>>, vector<8x128xbf16>
    %cst = arith.constant dense<0.000000e+00> : vector<128x128xf32>
    %3 = tpu.matmul %1, %2, %cst {dimension_numbers = #tpu.dot_dimension_numbers<[1], [0], [0], [1], [0, 0, 1, 1], [], []>} : vector<128x8xbf16>, vector<8x128xbf16>, vector<128x128xf32> -> vector<128x128xf32>
    %c0_4 = arith.constant 0 : index
    %c0_5 = arith.constant 0 : index
    %4 = vector.load %arg5[%c0_4, %c0_5] : memref<1x128xf32, #tpu.memory_space<vmem>>, vector<1x128xf32>
    %5 = vector.broadcast %4 : vector<1x128xf32> to vector<128x128xf32>
    %6 = arith.addf %3, %5 : vector<128x128xf32>
    %cst_6 = arith.constant 0.000000e+00 : f32
    %7 = vector.broadcast %cst_6 : f32 to vector<128x128xf32>
    %8 = arith.maximumf %6, %7 : vector<128x128xf32>
    %9 = arith.truncf %8 : vector<128x128xf32> to vector<128x128xbf16>
    %c0_7 = arith.constant 0 : index
    %c0_8 = arith.constant 0 : index
    %10 = vector.load %arg4[%c0_7, %c0_8] : memref<128x128xbf16, #tpu.memory_space<vmem>>, vector<128x128xbf16>
    %cst_9 = arith.constant dense<0.000000e+00> : vector<128x128xf32>
    %11 = tpu.matmul %9, %10, %cst_9 {dimension_numbers = #tpu.dot_dimension_numbers<[1], [0], [0], [1], [0, 0, 1, 1], [], []>} : vector<128x128xbf16>, vector<128x128xbf16>, vector<128x128xf32> -> vector<128x128xf32>
    %c0_10 = arith.constant 0 : index
    %c0_11 = arith.constant 0 : index
    %12 = vector.load %arg6[%c0_10, %c0_11] : memref<1x128xf32, #tpu.memory_space<vmem>>, vector<1x128xf32>
    %13 = vector.broadcast %12 : vector<1x128xf32> to vector<128x128xf32>
    %14 = arith.addf %11, %13 : vector<128x128xf32>
    %cst_12 = arith.constant 0.000000e+00 : f32
    %15 = vector.broadcast %cst_12 : f32 to vector<128x128xf32>
    %16 = arith.maximumf %14, %15 : vector<128x128xf32>
    %17 = vector.shape_cast %16 : vector<128x128xf32> to vector<8x16x128xf32>
    %cst_13 = arith.constant dense<0xFF800000> : vector<8x128xf32>
    %18 = vector.multi_reduction <maximumf>, %17, %cst_13 [1] : vector<8x16x128xf32> to vector<8x128xf32>
    %c0_i32 = arith.constant 0 : i32
    %19 = arith.cmpi eq, %arg1, %c0_i32 : i32
    %20 = arith.extui %19 : i1 to i32
    %c0_i32_14 = arith.constant 0 : i32
    %21 = arith.cmpi ne, %20, %c0_i32_14 : i32
    scf.if %21 {
      %c0_17 = arith.constant 0 : index
      %c0_18 = arith.constant 0 : index
      %25 = vector.load %arg7[%c0_17, %c0_18] : memref<8x128xf32, #tpu.memory_space<vmem>>, vector<8x128xf32>
      tpu.vector_store %arg7[%c0_17, %c0_18], %18 {strides = array<i32>} : memref<8x128xf32, #tpu.memory_space<vmem>>, vector<8x128xf32>,
    } else {
    }
    %c0_i32_15 = arith.constant 0 : i32
    %22 = arith.cmpi sgt, %arg1, %c0_i32_15 : i32
    %23 = arith.extui %22 : i1 to i32
    %c0_i32_16 = arith.constant 0 : i32
    %24 = arith.cmpi ne, %23, %c0_i32_16 : i32
    scf.if %24 {
      %c0_17 = arith.constant 0 : index
      %c0_18 = arith.constant 0 : index
      %25 = vector.load %arg7[%c0_17, %c0_18] : memref<8x128xf32, #tpu.memory_space<vmem>>, vector<8x128xf32>
      %26 = arith.maximumf %25, %18 : vector<8x128xf32>
      %c0_19 = arith.constant 0 : index
      %c0_20 = arith.constant 0 : index
      %27 = vector.load %arg7[%c0_19, %c0_20] : memref<8x128xf32, #tpu.memory_space<vmem>>, vector<8x128xf32>
      tpu.vector_store %arg7[%c0_19, %c0_20], %26 {strides = array<i32>} : memref<8x128xf32, #tpu.memory_space<vmem>>, vector<8x128xf32>,
    } else {
    }
    return
  }
  func.func @transform_0(%arg0: i32, %arg1: i32) -> (i32, i32, i32) {
    %c0_i32 = arith.constant 0 : i32
    %c0_i32_0 = arith.constant 0 : i32
    return %arg0, %arg1, %c0_i32 : i32, i32, i32
  }
  func.func @transform_1(%arg0: i32, %arg1: i32) -> (i32, i32) {
    %c0_i32 = arith.constant 0 : i32
    %c0_i32_0 = arith.constant 0 : i32
    %c0_i32_1 = arith.constant 0 : i32
    return %c0_i32, %c0_i32_0 : i32, i32
  }
  func.func @transform_2(%arg0: i32, %arg1: i32) -> (i32, i32) {
    %c0_i32 = arith.constant 0 : i32
    %c0_i32_0 = arith.constant 0 : i32
    %c0_i32_1 = arith.constant 0 : i32
    return %c0_i32, %c0_i32_0 : i32, i32
  }
  func.func @transform_3(%arg0: i32, %arg1: i32) -> (i32, i32) {
    %c0_i32 = arith.constant 0 : i32
    %c0_i32_0 = arith.constant 0 : i32
    %c0_i32_1 = arith.constant 0 : i32
    return %c0_i32, %c0_i32_0 : i32, i32
  }
  func.func @transform_4(%arg0: i32, %arg1: i32) -> (i32, i32) {
    %c0_i32 = arith.constant 0 : i32
    %c0_i32_0 = arith.constant 0 : i32
    %c0_i32_1 = arith.constant 0 : i32
    return %c0_i32, %c0_i32_0 : i32, i32
  }
  func.func @transform_5(%arg0: i32, %arg1: i32) -> (i32, i32) {
    %c0_i32 = arith.constant 0 : i32
    %c0_i32_0 = arith.constant 0 : i32
    return %arg0, %c0_i32 : i32, i32
  }
}

</mosaic_0001>

<llo_original>
// kernel: tpu_custom_call.1
$region0: #{tpu_custom_call.1}
  #allocation0 [shape = 'u32[]', space=smem, size = 0x4, offset = 0x4, fixed_abs, tag = 'smem constant byte address 0x4 - core index']
  #allocation1 [shape = 'u32[144,128]{1,0:T(1,128)}', space=vmem, size = 0x12000, scoped, tag = 'internal scratch']
  %s0 = inlined_call_operand.vmem [shape: bf16[8,16,8], index: 0, kind: input, shape index: {}]
  %s1 = inlined_call_operand.vmem [shape: bf16[8,128], index: 1, kind: input, shape index: {}]
  %s2 = inlined_call_operand.vmem [shape: bf16[128,128], index: 2, kind: input, shape index: {}]
  %s3 = inlined_call_operand.vmem [shape: f32[1,128], index: 3, kind: input, shape index: {}]
  %s4 = inlined_call_operand.vmem [shape: f32[1,128], index: 4, kind: input, shape index: {}]
  %s5 = inlined_call_operand.hbm [shape: f32[8,128], index: 5, kind: output, shape index: {}]
  %s6 = sld [smem:[#allocation0]]
  $region38: #{tpu_custom_call.1} parent=0
    _
  %s8 = ssub.s32 1, %s6
  %s9 = scalar_select 0, %s8, %s6
  $region1: #{tpu_custom_call.1} parent=0
    #allocation2 [shape = 'u8[4096]{0}', space=vmem, size = 0x1000, scoped, tag = 'output window, operand 0, single buffered']
    #allocation3 [shape = 's32[1]{0}', space=sflag, size = 0x4, scoped, tag = 'scoped memory for tpu_custom_call.1']
    %10 = vsyncpa [#allocation3], 0
    // Predicated region
    $region2: #{tpu_custom_call.1} parent=1 // pred_check
      _
    $region3: #{tpu_custom_call.1} parent=1 // pred_check_branch
      %12 = sbr.rel (0) target = $region5
    $region4: #{tpu_custom_call.1} parent=1 // pred_region
      _
    $region5: #{tpu_custom_call.1} parent=1 // pred_fallthru
      _
    // Predicated region
    $region6: #{tpu_custom_call.1} parent=1 // pred_check
      _
    $region7: #{tpu_custom_call.1} parent=1 // pred_check_branch
      %14 = sbr.rel (0) target = $region9
    $region8: #{tpu_custom_call.1} parent=1 // pred_region
      _
    $region9: #{tpu_custom_call.1} parent=1 // pred_fallthru
      _
    // Predicated region
    $region10: #{tpu_custom_call.1} parent=1 // pred_check
      _
    $region11: #{tpu_custom_call.1} parent=1 // pred_check_branch
      %16 = sbr.rel (0) target = $region13
    $region12: #{tpu_custom_call.1} parent=1 // pred_region
      _
    $region13: #{tpu_custom_call.1} parent=1 // pred_fallthru
      _
    // Predicated region
    $region14: #{tpu_custom_call.1} parent=1 // pred_check
      _
    $region15: #{tpu_custom_call.1} parent=1 // pred_check_branch
      %18 = sbr.rel (0) target = $region17
    $region16: #{tpu_custom_call.1} parent=1 // pred_region
      _
    $region17: #{tpu_custom_call.1} parent=1 // pred_fallthru
      _
    // Predicated region
    $region18: #{tpu_custom_call.1} parent=1 // pred_check
      _
    $region19: #{tpu_custom_call.1} parent=1 // pred_check_branch
      %20 = sbr.rel (0) target = $region21
    $region20: #{tpu_custom_call.1} parent=1 // pred_region
      _
    $region21: #{tpu_custom_call.1} parent=1 // pred_fallthru
      _
    %v22 = vld [vmem:[%s0] sm:$0xf]
    %v23 = vld [vmem:[%s0 + $0x4] sm:$0xf]
    %v24 = vld [vmem:[%s0 + $0x8] sm:$0xf]
    %v25 = vld [vmem:[%s0 + $0xc] sm:$0xf]
    %v26 = vld [vmem:[%s0 + $0x10] sm:$0xf]
    %v27 = vld [vmem:[%s0 + $0x14] sm:$0xf]
    %v28 = vld [vmem:[%s0 + $0x18] sm:$0xf]
    %v29 = vld [vmem:[%s0 + $0x1c] sm:$0xf]
    %v30 = vld [vmem:[%s0 + $0x20] sm:$0xf]
    %v31 = vld [vmem:[%s0 + $0x24] sm:$0xf]
    %v32 = vld [vmem:[%s0 + $0x28] sm:$0xf]
    %v33 = vld [vmem:[%s0 + $0x2c] sm:$0xf]
    %v34 = vld [vmem:[%s0 + $0x30] sm:$0xf]
    %v35 = vld [vmem:[%s0 + $0x34] sm:$0xf]
    %v36 = vld [vmem:[%s0 + $0x38] sm:$0xf]
    %v37 = vld [vmem:[%s0 + $0x3c] sm:$0xf]
    %v38 = vld [vmem:[%s1] sm:$0xf]
    %v39 = vld [vmem:[%s3] sm:$0x1]
    %v41 = vlaneseq
    %v42 = vshrl.u32 %v41, 7
    %v43 = vsub.s32 0, %v42
    %v44 = vrot.slane %v39, %v43
    %v62 = vunpack.c.l.b16 %v22
    %v63 = vunpack.c.l.b16 %v23
    %v64 = vunpack.c.l.b16 %v24
    %v65 = vunpack.c.l.b16 %v25
    %v66 = vunpack.c.l.b16 %v26
    %v67 = vunpack.c.l.b16 %v27
    %v68 = vunpack.c.l.b16 %v28
    %v69 = vunpack.c.l.b16 %v29
    %v70 = vunpack.c.l.b16 %v30
    %v71 = vunpack.c.l.b16 %v31
    %v72 = vunpack.c.l.b16 %v32
    %v73 = vunpack.c.l.b16 %v33
    %v74 = vunpack.c.l.b16 %v34
    %v75 = vunpack.c.l.b16 %v35
    %v76 = vunpack.c.l.b16 %v36
    %v77 = vunpack.c.l.b16 %v37
    %v78 = vpack.c.b16 %v63, %v62
    %v79 = vpack.c.b16 %v65, %v64
    %v80 = vpack.c.b16 %v67, %v66
    %v81 = vpack.c.b16 %v69, %v68
    %v82 = vpack.c.b16 %v71, %v70
    %v83 = vpack.c.b16 %v73, %v72
    %v84 = vpack.c.b16 %v75, %v74
    %v85 = vpack.c.b16 %v77, %v76
    %vm86 = vcmask 64512
    %v88 = vsel %vm86, %v78, 0
    %v91 = vsel %vm86, %v79, 0
    %v94 = vsel %vm86, %v80, 0
    %v97 = vsel %vm86, %v81, 0
    %v100 = vsel %vm86, %v82, 0
    %v103 = vsel %vm86, %v83, 0
    %v106 = vsel %vm86, %v84, 0
    %v109 = vsel %vm86, %v85, 0
    %vm111 = vcmask 1043456
    %v113 = vsel %vm111, %v38, 0
    %115 = vmatprep.subr.bf16.mxu0 0
    %116 = vmatpush1.bf16.msra.mxu0 %v113
    %117 = vmatprep.subr.bf16.mxu0 0
    %118 = vmatpush1.bf16.msra.mxu0 0
    %119 = vmatprep.subr.bf16.mxu0 0
    %120 = vmatpush1.bf16.msra.mxu0 0
    %121 = vmatprep.subr.bf16.mxu0 0
    %122 = vmatpush1.bf16.msra.mxu0 0
    %123 = vmatprep.subr.bf16.mxu0 0
    %124 = vmatpush1.bf16.msra.mxu0 0
    %125 = vmatprep.subr.bf16.mxu0 0
    %126 = vmatpush1.bf16.msra.mxu0 0
    %127 = vmatprep.subr.bf16.mxu0 0
    %128 = vmatpush1.bf16.msra.mxu0 0
    %129 = vmatprep.subr.bf16.mxu0 0
    %130 = vmatpush1.bf16.msra.mxu0 0
    %131 = vmatprep.subr.bf16.mxu0 0
    %132 = vmatpush1.bf16.msra.mxu0 0
    %133 = vmatprep.subr.bf16.mxu0 0
    %134 = vmatpush1.bf16.msra.mxu0 0
    %135 = vmatprep.subr.bf16.mxu0 0
    %136 = vmatpush1.bf16.msra.mxu0 0
    %137 = vmatprep.subr.bf16.mxu0 0
    %138 = vmatpush1.bf16.msra.mxu0 0
    %139 = vmatprep.subr.bf16.mxu0 0
    %140 = vmatpush1.bf16.msra.mxu0 0
    %141 = vmatprep.subr.bf16.mxu0 0
    %142 = vmatpush1.bf16.msra.mxu0 0
    %143 = vmatprep.subr.bf16.mxu0 0
    %144 = vmatpush1.bf16.msra.mxu0 0
    %145 = vmatprep.subr.bf16.mxu0 0
    %146 = vmatpush1.bf16.msra.mxu0 0
    %147 = vmatprep.mubr.bf16.mxu0 0
    %148 = vmatmul.mubr.bf16.gmra.mrb[0].mxu0 %v88
    %v149 = vpop.f32.mrb[0].mxu0
    %v150 = vadd.f32 %v44, %v149
    %v151 = vpop.f32.mrb[0].mxu0
    %v152 = vpop.f32.mrb[0].mxu0
    %v153 = vadd.f32 %v44, %v152
    %v154 = vpop.f32.mrb[0].mxu0
    %155 = vmatprep.mubr.bf16.mxu0 0
    %156 = vmatmul.mubr.bf16.gmra.mrb[0].mxu0 %v91
    %v157 = vpop.f32.mrb[0].mxu0
    %v158 = vadd.f32 %v44, %v157
    %v159 = vpop.f32.mrb[0].mxu0
    %v160 = vpop.f32.mrb[0].mxu0
    %v161 = vadd.f32 %v44, %v160
    %v162 = vpop.f32.mrb[0].mxu0
    %163 = vmatprep.mubr.bf16.mxu0 0
    %164 = vmatmul.mubr.bf16.gmra.mrb[0].mxu0 %v94
    %v165 = vpop.f32.mrb[0].mxu0
    %v166 = vadd.f32 %v44, %v165
    %v167 = vpop.f32.mrb[0].mxu0
    %v168 = vpop.f32.mrb[0].mxu0
    %v169 = vadd.f32 %v44, %v168
    %v170 = vpop.f32.mrb[0].mxu0
    %171 = vmatprep.mubr.bf16.mxu0 0
    %172 = vmatmul.mubr.bf16.gmra.mrb[0].mxu0 %v97
    %v173 = vpop.f32.mrb[0].mxu0
    %v174 = vadd.f32 %v44, %v173
    %v175 = vpop.f32.mrb[0].mxu0
    %v176 = vpop.f32.mrb[0].mxu0
    %v177 = vadd.f32 %v44, %v176
    %v178 = vpop.f32.mrb[0].mxu0
    %179 = vmatprep.mubr.bf16.mxu0 0
    %180 = vmatmul.mubr.bf16.gmra.mrb[0].mxu0 %v100
    %v181 = vpop.f32.mrb[0].mxu0
    %v182 = vadd.f32 %v44, %v181
    %v183 = vpop.f32.mrb[0].mxu0
    %v184 = vpop.f32.mrb[0].mxu0
    %v185 = vadd.f32 %v44, %v184
    %v186 = vpop.f32.mrb[0].mxu0
    %187 = vmatprep.mubr.bf16.mxu0 0
    %188 = vmatmul.mubr.bf16.gmra.mrb[0].mxu0 %v103
    %v189 = vpop.f32.mrb[0].mxu0
    %v190 = vadd.f32 %v44, %v189
    %v191 = vpop.f32.mrb[0].mxu0
    %v192 = vpop.f32.mrb[0].mxu0
    %v193 = vadd.f32 %v44, %v192
    %v194 = vpop.f32.mrb[0].mxu0
    %195 = vmatprep.mubr.bf16.mxu0 0
    %196 = vmatmul.mubr.bf16.gmra.mrb[0].mxu0 %v106
    %v197 = vpop.f32.mrb[0].mxu0
    %v198 = vadd.f32 %v44, %v197
    %v199 = vpop.f32.mrb[0].mxu0
    %v200 = vpop.f32.mrb[0].mxu0
    %v201 = vadd.f32 %v44, %v200
    %v202 = vpop.f32.mrb[0].mxu0
    %203 = vmatprep.mubr.bf16.mxu0 0
    %204 = vmatmul.mubr.bf16.gmra.mrb[0].mxu0 %v109
    %v205 = vpop.f32.mrb[0].mxu0
    %v206 = vadd.f32 %v44, %v205
    %v207 = vpop.f32.mrb[0].mxu0
    %v208 = vpop.f32.mrb[0].mxu0
    %v209 = vadd.f32 %v44, %v208
    %v210 = vpop.f32.mrb[0].mxu0
    %211 = vdwg.mxu0
    %v212 = vmax.f32 %v150, 0.0
    %v213 = vmax.f32 %v153, 0.0
    %v214 = vmax.f32 %v158, 0.0
    %v215 = vmax.f32 %v161, 0.0
    %v216 = vmax.f32 %v166, 0.0
    %v217 = vmax.f32 %v169, 0.0
    %v218 = vmax.f32 %v174, 0.0
    %v219 = vmax.f32 %v177, 0.0
    %v220 = vmax.f32 %v182, 0.0
    %v221 = vmax.f32 %v185, 0.0
    %v222 = vmax.f32 %v190, 0.0
    %v223 = vmax.f32 %v193, 0.0
    %v224 = vmax.f32 %v198, 0.0
    %v225 = vmax.f32 %v201, 0.0
    %v226 = vmax.f32 %v206, 0.0
    %v227 = vmax.f32 %v209, 0.0
    %v228 = vpack.c.bf16 %v213, %v212
    %v229 = vpack.c.bf16 %v215, %v214
    %v230 = vpack.c.bf16 %v217, %v216
    %v231 = vpack.c.bf16 %v219, %v218
    %v232 = vpack.c.bf16 %v221, %v220
    %v233 = vpack.c.bf16 %v223, %v222
    %v234 = vpack.c.bf16 %v225, %v224
    %v235 = vpack.c.bf16 %v227, %v226
    %v236 = vld [vmem:[%s2] sm:$0xf]
    %v237 = vld [vmem:[%s2 + $0x4] sm:$0xf]
    %v238 = vld [vmem:[%s2 + $0x8] sm:$0xf]
    %v239 = vld [vmem:[%s2 + $0xc] sm:$0xf]
    %v240 = vld [vmem:[%s2 + $0x10] sm:$0xf]
    %v241 = vld [vmem:[%s2 + $0x14] sm:$0xf]
    %v242 = vld [vmem:[%s2 + $0x18] sm:$0xf]
    %v243 = vld [vmem:[%s2 + $0x1c] sm:$0xf]
    %v244 = vld [vmem:[%s2 + $0x20] sm:$0xf]
    %v245 = vld [vmem:[%s2 + $0x24] sm:$0xf]
    %v246 = vld [vmem:[%s2 + $0x28] sm:$0xf]
    %v247 = vld [vmem:[%s2 + $0x2c] sm:$0xf]
    %v248 = vld [vmem:[%s2 + $0x30] sm:$0xf]
    %v249 = vld [vmem:[%s2 + $0x34] sm:$0xf]
    %v250 = vld [vmem:[%s2 + $0x38] sm:$0xf]
    %v251 = vld [vmem:[%s2 + $0x3c] sm:$0xf]
    %v252 = vld [vmem:[%s4] sm:$0x1]
    %v254 = vlaneseq
    %v255 = vshrl.u32 %v254, 7
    %v256 = vsub.s32 0, %v255
    %v257 = vrot.slane %v252, %v256
    %v275 = vunpack.c.l.b16 %v236
    %v276 = vunpack.c.l.b16 %v237
    %v277 = vunpack.c.l.b16 %v238
    %v278 = vunpack.c.l.b16 %v239
    %v279 = vunpack.c.l.b16 %v240
    %v280 = vunpack.c.l.b16 %v241
    %v281 = vunpack.c.l.b16 %v242
    %v282 = vunpack.c.l.b16 %v243
    %v283 = vunpack.c.l.b16 %v244
    %v284 = vunpack.c.l.b16 %v245
    %v285 = vunpack.c.l.b16 %v246
    %v286 = vunpack.c.l.b16 %v247
    %v287 = vunpack.c.l.b16 %v248
    %v288 = vunpack.c.l.b16 %v249
    %v289 = vunpack.c.l.b16 %v250
    %v290 = vunpack.c.l.b16 %v251
    %v291 = vpack.c.b16 %v276, %v275
    %v292 = vpack.c.b16 %v278, %v277
    %v293 = vpack.c.b16 %v280, %v279
    %v294 = vpack.c.b16 %v282, %v281
    %v295 = vpack.c.b16 %v284, %v283
    %v296 = vpack.c.b16 %v286, %v285
    %v297 = vpack.c.b16 %v288, %v287
    %v298 = vpack.c.b16 %v290, %v289
    %307 = vmatprep.subr.bf16.mxu0 0
    %308 = vmatpush1.bf16.msra.mxu0 %v291
    %309 = vmatprep.subr.bf16.mxu0 0
    %310 = vmatpush1.bf16.msra.mxu0 %v292
    %311 = vmatprep.subr.bf16.mxu0 0
    %312 = vmatpush1.bf16.msra.mxu0 %v293
    %313 = vmatprep.subr.bf16.mxu0 0
    %314 = vmatpush1.bf16.msra.mxu0 %v294
    %315 = vmatprep.subr.bf16.mxu0 0
    %316 = vmatpush1.bf16.msra.mxu0 %v295
    %317 = vmatprep.subr.bf16.mxu0 0
    %318 = vmatpush1.bf16.msra.mxu0 %v296
    %319 = vmatprep.subr.bf16.mxu0 0
    %320 = vmatpush1.bf16.msra.mxu0 %v297
    %321 = vmatprep.subr.bf16.mxu0 0
    %322 = vmatpush1.bf16.msra.mxu0 %v298
    %323 = vmatprep.subr.bf16.mxu0 0
    %324 = vmatpush1.bf16.msra.mxu0 0
    %325 = vmatprep.subr.bf16.mxu0 0
    %326 = vmatpush1.bf16.msra.mxu0 0
    %327 = vmatprep.subr.bf16.mxu0 0
    %328 = vmatpush1.bf16.msra.mxu0 0
    %329 = vmatprep.subr.bf16.mxu0 0
    %330 = vmatpush1.bf16.msra.mxu0 0
    %331 = vmatprep.subr.bf16.mxu0 0
    %332 = vmatpush1.bf16.msra.mxu0 0
    %333 = vmatprep.subr.bf16.mxu0 0
    %334 = vmatpush1.bf16.msra.mxu0 0
    %335 = vmatprep.subr.bf16.mxu0 0
    %336 = vmatpush1.bf16.msra.mxu0 0
    %337 = vmatprep.subr.bf16.mxu0 0
    %338 = vmatpush1.bf16.msra.mxu0 0
    %339 = vmatprep.mubr.bf16.mxu0 0
    %340 = vmatmul.mubr.bf16.gmra.mrb[0].mxu0 %v228
    %v341 = vpop.f32.mrb[0].mxu0
    %v342 = vadd.f32 %v257, %v341
    %v343 = vpop.f32.mrb[0].mxu0
    %v344 = vpop.f32.mrb[0].mxu0
    %v345 = vadd.f32 %v257, %v344
    %v346 = vpop.f32.mrb[0].mxu0
    %347 = vmatprep.mubr.bf16.mxu0 0
    %348 = vmatmul.mubr.bf16.gmra.mrb[0].mxu0 %v229
    %v349 = vpop.f32.mrb[0].mxu0
    %v350 = vadd.f32 %v257, %v349
    %v351 = vpop.f32.mrb[0].mxu0
    %v352 = vpop.f32.mrb[0].mxu0
    %v353 = vadd.f32 %v257, %v352
    %v354 = vpop.f32.mrb[0].mxu0
    %355 = vmatprep.mubr.bf16.mxu0 0
    %356 = vmatmul.mubr.bf16.gmra.mrb[0].mxu0 %v230
    %v357 = vpop.f32.mrb[0].mxu0
    %v358 = vadd.f32 %v257, %v357
    %v359 = vpop.f32.mrb[0].mxu0
    %v360 = vpop.f32.mrb[0].mxu0
    %v361 = vadd.f32 %v257, %v360
    %v362 = vpop.f32.mrb[0].mxu0
    %363 = vmatprep.mubr.bf16.mxu0 0
    %364 = vmatmul.mubr.bf16.gmra.mrb[0].mxu0 %v231
    %v365 = vpop.f32.mrb[0].mxu0
    %v366 = vadd.f32 %v257, %v365
    %v367 = vpop.f32.mrb[0].mxu0
    %v368 = vpop.f32.mrb[0].mxu0
    %v369 = vadd.f32 %v257, %v368
    %v370 = vpop.f32.mrb[0].mxu0
    %371 = vmatprep.mubr.bf16.mxu0 0
    %372 = vmatmul.mubr.bf16.gmra.mrb[0].mxu0 %v232
    %v373 = vpop.f32.mrb[0].mxu0
    %v374 = vadd.f32 %v257, %v373
    %v375 = vpop.f32.mrb[0].mxu0
    %v376 = vpop.f32.mrb[0].mxu0
    %v377 = vadd.f32 %v257, %v376
    %v378 = vpop.f32.mrb[0].mxu0
    %379 = vmatprep.mubr.bf16.mxu0 0
    %380 = vmatmul.mubr.bf16.gmra.mrb[0].mxu0 %v233
    %v381 = vpop.f32.mrb[0].mxu0
    %v382 = vadd.f32 %v257, %v381
    %v383 = vpop.f32.mrb[0].mxu0
    %v384 = vpop.f32.mrb[0].mxu0
    %v385 = vadd.f32 %v257, %v384
    %v386 = vpop.f32.mrb[0].mxu0
    %387 = vmatprep.mubr.bf16.mxu0 0
    %388 = vmatmul.mubr.bf16.gmra.mrb[0].mxu0 %v234
    %v389 = vpop.f32.mrb[0].mxu0
    %v390 = vadd.f32 %v257, %v389
    %v391 = vpop.f32.mrb[0].mxu0
    %v392 = vpop.f32.mrb[0].mxu0
    %v393 = vadd.f32 %v257, %v392
    %v394 = vpop.f32.mrb[0].mxu0
    %395 = vmatprep.mubr.bf16.mxu0 0
    %396 = vmatmul.mubr.bf16.gmra.mrb[0].mxu0 %v235
    %v397 = vpop.f32.mrb[0].mxu0
    %v398 = vadd.f32 %v257, %v397
    %v399 = vpop.f32.mrb[0].mxu0
    %v400 = vpop.f32.mrb[0].mxu0
    %v401 = vadd.f32 %v257, %v400
    %v402 = vpop.f32.mrb[0].mxu0
    %403 = vdwg.mxu0
    %v404 = vmax.f32 %v342, 0.0
    %v405 = vmax.f32 %v345, 0.0
    %v406 = vmax.f32 %v350, 0.0
    %v407 = vmax.f32 %v353, 0.0
    %v408 = vmax.f32 %v358, 0.0
    %v409 = vmax.f32 %v361, 0.0
    %v410 = vmax.f32 %v366, 0.0
    %v411 = vmax.f32 %v369, 0.0
    %v412 = vmax.f32 %v374, 0.0
    %v413 = vmax.f32 %v377, 0.0
    %v414 = vmax.f32 %v382, 0.0
    %v415 = vmax.f32 %v385, 0.0
    %v416 = vmax.f32 %v390, 0.0
    %v417 = vmax.f32 %v393, 0.0
    %v418 = vmax.f32 %v398, 0.0
    %v419 = vmax.f32 %v401, 0.0
    %v420 = vmax.f32 %v404, %v405
    %v421 = vrot.slane %v420, 4
    %v422 = vmax.f32 %v420, %v421
    %v423 = vrot.slane %v422, 2
    %v424 = vmax.f32 %v422, %v423
    %v425 = vrot.slane %v424, 1
    %v426 = vmax.f32 %v424, %v425
    %v427 = vmax.f32 %v406, %v407
    %v428 = vrot.slane %v427, 4
    %v429 = vmax.f32 %v427, %v428
    %v430 = vrot.slane %v429, 2
    %v431 = vmax.f32 %v429, %v430
    %v432 = vrot.slane %v431, 1
    %v433 = vmax.f32 %v431, %v432
    %v434 = vmax.f32 %v408, %v409
    %v435 = vrot.slane %v434, 4
    %v436 = vmax.f32 %v434, %v435
    %v437 = vrot.slane %v436, 2
    %v438 = vmax.f32 %v436, %v437
    %v439 = vrot.slane %v438, 1
    %v440 = vmax.f32 %v438, %v439
    %v441 = vmax.f32 %v410, %v411
    %v442 = vrot.slane %v441, 4
    %v443 = vmax.f32 %v441, %v442
    %v444 = vrot.slane %v443, 2
    %v445 = vmax.f32 %v443, %v444
    %v446 = vrot.slane %v445, 1
    %v447 = vmax.f32 %v445, %v446
    %v448 = vmax.f32 %v412, %v413
    %v449 = vrot.slane %v448, 4
    %v450 = vmax.f32 %v448, %v449
    %v451 = vrot.slane %v450, 2
    %v452 = vmax.f32 %v450, %v451
    %v453 = vrot.slane %v452, 1
    %v454 = vmax.f32 %v452, %v453
    %v455 = vmax.f32 %v414, %v415
    %v456 = vrot.slane %v455, 4
    %v457 = vmax.f32 %v455, %v456
    %v458 = vrot.slane %v457, 2
    %v459 = vmax.f32 %v457, %v458
    %v460 = vrot.slane %v459, 1
    %v461 = vmax.f32 %v459, %v460
    %v462 = vmax.f32 %v416, %v417
    %v463 = vrot.slane %v462, 4
    %v464 = vmax.f32 %v462, %v463
    %v465 = vrot.slane %v464, 2
    %v466 = vmax.f32 %v464, %v465
    %v467 = vrot.slane %v466, 1
    %v468 = vmax.f32 %v466, %v467
    %v469 = vmax.f32 %v418, %v419
    %v470 = vrot.slane %v469, 4
    %v471 = vmax.f32 %v469, %v470
    %v472 = vrot.slane %v471, 2
    %v473 = vmax.f32 %v471, %v472
    %v474 = vrot.slane %v473, 1
    %v475 = vmax.f32 %v473, %v474
    %p476 = scmp.eq.s32.totalorder 0, 0
    // Predicated region
    $region22: #{tpu_custom_call.1} parent=1 // pred_check
      %p477 = pneg %p476
    $region23: #{tpu_custom_call.1} parent=1 // pred_check_branch
      %479 = sbr.rel (%p477) target = $region25
    $region24: #{tpu_custom_call.1} parent=1 // pred_region
      %vm488 = vcmask 1041409
      %v489 = vsel %vm488, %v433, %v426
      %vm490 = vcmask 1042434
      %v491 = vsel %vm490, %v440, %v489
      %vm492 = vcmask 1043459
      %v493 = vsel %vm492, %v447, %v491
      %vm494 = vcmask 1044484
      %v495 = vsel %vm494, %v454, %v493
      %vm496 = vcmask 1045509
      %v497 = vsel %vm496, %v461, %v495
      %vm498 = vcmask 1046534
      %v499 = vsel %vm498, %v468, %v497
      %vm500 = vcmask 1047559
      %v501 = vsel %vm500, %v475, %v499
      %503 = vst [vmem:[#allocation2] sm:$0xff] %v501
    $region25: #{tpu_custom_call.1} parent=1 // pred_fallthru
      _
    %p504 = scmp.gt.s32.totalorder 0, 0
    // Predicated region
    $region26: #{tpu_custom_call.1} parent=1 // pred_check
      %p505 = pneg %p504
    $region27: #{tpu_custom_call.1} parent=1 // pred_check_branch
      %507 = sbr.rel (%p505) target = $region29
    $region28: #{tpu_custom_call.1} parent=1 // pred_region
      %v508 = vld [vmem:[#allocation2] sm:$0xff]
      %vm517 = vcmask 1041409
      %v518 = vsel %vm517, %v433, %v426
      %vm519 = vcmask 1042434
      %v520 = vsel %vm519, %v440, %v518
      %vm521 = vcmask 1043459
      %v522 = vsel %vm521, %v447, %v520
      %vm523 = vcmask 1044484
      %v524 = vsel %vm523, %v454, %v522
      %vm525 = vcmask 1045509
      %v526 = vsel %vm525, %v461, %v524
      %vm527 = vcmask 1046534
      %v528 = vsel %vm527, %v468, %v526
      %vm529 = vcmask 1047559
      %v530 = vsel %vm529, %v475, %v528
      %v532 = vmax.f32 %v508, %v530
      %533 = vst [vmem:[#allocation2] sm:$0xff] %v532
    $region29: #{tpu_custom_call.1} parent=1 // pred_fallthru
      _
    // Predicated region
    $region30: #{tpu_custom_call.1} parent=1 // pred_check
      _
    $region31: #{tpu_custom_call.1} parent=1 // pred_check_branch
      %535 = sbr.rel (0) target = $region33
    $region32: #{tpu_custom_call.1} parent=1 // pred_region
      %s537 = ssub.s32 128, 128
      %538 = vsyncadd [#allocation3], %s537
      %s540 = sshll.u32 [#allocation2], 4
      %s541 = int_to_ptr.vmem [resolvable:$true] %s540
      %543 = dma.vmem_to_hbm [thread:$0]  %s541, 128, %s5, [#allocation3]
    $region33: #{tpu_custom_call.1} parent=1 // pred_fallthru
      _
    // Predicated region
    $region34: #{tpu_custom_call.1} parent=1 // pred_check
      _
    $region35: #{tpu_custom_call.1} parent=1 // pred_check_branch
      %545 = sbr.rel (0) target = $region37
    $region36: #{tpu_custom_call.1} parent=1 // pred_region
      %546 = dma.done [#allocation3], 128
    $region37: #{tpu_custom_call.1} parent=1 // pred_fallthru
      _
    %547 = vsyncpa [#allocation3], 1

</llo_original>
